<compile_context>
chip_gen: v7x
topology: tpu7x:2x2x1
jax: 0.10.0
libtpu: 0.0.40
codegen_flags: <defaults>
</compile_context>

<pallas_src>
import functools

import jax
import jax.numpy as jnp
from jax.experimental import pallas as pl
from jax.experimental.pallas import tpu as pltpu

BN_EPS = 1e-5
LANE = 128  # TPU lane width: pad feature dims to multiples of this.


def _round_up(n, m):
    return ((n + m - 1) // m) * m


# ---------------------------------------------------------------------------
# Fused kernel: the whole MLP in one pallas_call.
# refs layout: x, [w_i, gamma_i, beta_i] * num_hidden, w_last, b_last, o_ref
# ---------------------------------------------------------------------------
def _mlp_fused_kernel(num_hidden, *refs):
    x_ref = refs[0]
    o_ref = refs[-1]

    h = x_ref[...]                      # no dtype pre-cast; MXU takes native dtype
    idx = 1
    for _ in range(num_hidden):
        w_ref, gamma_ref, beta_ref = refs[idx], refs[idx + 1], refs[idx + 2]
        idx += 3
        # Linear (bias omitted: cancelled by BN mean subtraction), f32 accumulate.
        y = jnp.dot(h, w_ref[...], preferred_element_type=jnp.float32)
        # BatchNorm1d training semantics: batch mean / biased variance over axis 0.
        mean = jnp.mean(y, axis=0, keepdims=True)
        centered = y - mean             # reused for variance and normalization
        var = jnp.mean(centered * centered, axis=0, keepdims=True)
        y = centered * jax.lax.rsqrt(var + BN_EPS) * gamma_ref[...] + beta_ref[...]
        # ReLU; h stays resident on-chip for the next layer.
        h = jnp.maximum(y, 0.0)

    w_ref, b_ref = refs[idx], refs[idx + 1]
    y = jnp.dot(h, w_ref[...], preferred_element_type=jnp.float32) + b_ref[...]
    o_ref[...] = y.astype(o_ref.dtype)  # lane-dense (padded to 128) full-width store


def _full_spec(shape):
    return pl.BlockSpec(shape, lambda: tuple(0 for _ in shape))


@functools.partial(jax.jit, static_argnames=("output_size",))
def mlp_forward(kernel_params, x, *, output_size):
    """Run the whole MLP as a single fused Pallas kernel; returns (B, output_size)."""
    B = x.shape[0]
    num_hidden = len(kernel_params) - 1
    out_pad = kernel_params[-1]["w"].shape[1]

    inputs = [x]
    in_specs = [_full_spec(x.shape)]
    for layer in kernel_params[:-1]:
        for name in ("w", "gamma", "beta"):
            inputs.append(layer[name])
            in_specs.append(_full_spec(layer[name].shape))
    last = kernel_params[-1]
    inputs += [last["w"], last["b"]]
    in_specs += [_full_spec(last["w"].shape), _full_spec(last["b"].shape)]

    out = pl.pallas_call(
        functools.partial(_mlp_fused_kernel, num_hidden),
        out_shape=jax.ShapeDtypeStruct((B, out_pad), x.dtype),
        in_specs=in_specs,
        out_specs=_full_spec((B, out_pad)),
        # Headroom for full-block weights (v5e scoped default is only 16 MiB);
        # 32 MiB is within every generation's scoped/physical budget.
        compiler_params=pltpu.CompilerParams(vmem_limit_bytes=32 * 1024 * 1024),
    )(*inputs)
    # Strip lane padding of the final layer.
    return out[:, :output_size]


# ---------------------------------------------------------------------------
# Parameters
# ---------------------------------------------------------------------------
def init_mlp_params(key, input_size, output_size, hidden_layers):
    """Deterministic init mirroring the PyTorch module's layer shapes
    (weights stored pre-transposed as (in, out) == PyTorch weight.T)."""
    sizes = [input_size] + list(hidden_layers) + [output_size]
    params = []
    for i, (fan_in, fan_out) in enumerate(zip(sizes[:-1], sizes[1:])):
        key, kw, kb = jax.random.split(key, 3)
        bound = 1.0 / (fan_in ** 0.5)
        w = jax.random.uniform(kw, (fan_in, fan_out), jnp.float32, -bound, bound)
        b = jax.random.uniform(kb, (1, fan_out), jnp.float32, -bound, bound)
        layer = dict(w=w, b=b)
        if i != len(sizes) - 2:  # hidden layer -> has BatchNorm affine params
            layer["gamma"] = jnp.ones((1, fan_out), jnp.float32)
            layer["beta"] = jnp.zeros((1, fan_out), jnp.float32)
        params.append(layer)
    return params


def pad_kernel_params(params, input_size):
    """One-time zero-padding of feature dims to 128 lanes for the fused kernel.
    Hidden-layer biases are dropped (mathematically cancelled by BatchNorm)."""
    padded = []
    in_dim = input_size  # x itself is left unpadded; first W keeps its real rows
    for i, layer in enumerate(params):
        fan_in, fan_out = layer["w"].shape
        out_pad = _round_up(fan_out, LANE)
        w = jnp.zeros((in_dim, out_pad), jnp.float32).at[:fan_in, :fan_out].set(layer["w"])
        if i < len(params) - 1:
            gamma = jnp.zeros((1, out_pad), jnp.float32).at[:, :fan_out].set(layer["gamma"])
            beta = jnp.zeros((1, out_pad), jnp.float32).at[:, :fan_out].set(layer["beta"])
            padded.append(dict(w=w, gamma=gamma, beta=beta))
        else:
            b = jnp.zeros((1, out_pad), jnp.float32).at[:, :fan_out].set(layer["b"])
            padded.append(dict(w=w, b=b))
        in_dim = out_pad
    return padded


# ---------------------------------------------------------------------------
# Pure-JAX reference with the original module's exact semantics
# (hidden biases included; unpadded shapes).
# ---------------------------------------------------------------------------
def mlp_forward_ref(params, x):
    h = x
    for layer in params[:-1]:
        y = h @ layer["w"] + layer["b"]
        mean = jnp.mean(y, axis=0, keepdims=True)
        var = jnp.mean((y - mean) ** 2, axis=0, keepdims=True)
        y = (y - mean) / jnp.sqrt(var + BN_EPS) * layer["gamma"] + layer["beta"]
        h = jnp.maximum(y, 0.0)
    return h @ params[-1]["w"] + params[-1]["b"]


if __name__ == "__main__":
    key = jax.random.PRNGKey(0)

    batch = 8
    input_size = 16
    hidden_layers = [32, 32]
    output_size = 8

    kx, kp = jax.random.split(key)
    x = jax.random.normal(kx, (batch, input_size), jnp.float32)

    params = init_mlp_params(kp, input_size, output_size, hidden_layers)
    kernel_params = pad_kernel_params(params, input_size)

    out = mlp_forward(kernel_params, x, output_size=output_size)
    out = jax.block_until_ready(out)

    ref = mlp_forward_ref(params, x)
    assert out.shape == (batch, output_size)
    assert jnp.allclose(out, ref, rtol=1e-4, atol=1e-4), "mismatch vs JAX reference"

    print("KERNEL_OK")
</pallas_src>

<mosaic_0001>
module attributes {stable_mosaic.version = 11 : i64} {
  func.func @_mlp_fused_kernel(%arg0: memref<8x16xf32, #tpu.memory_space<vmem>>, %arg1: memref<16x128xf32, #tpu.memory_space<vmem>>, %arg2: memref<1x128xf32, #tpu.memory_space<vmem>>, %arg3: memref<1x128xf32, #tpu.memory_space<vmem>>, %arg4: memref<128x128xf32, #tpu.memory_space<vmem>>, %arg5: memref<1x128xf32, #tpu.memory_space<vmem>>, %arg6: memref<1x128xf32, #tpu.memory_space<vmem>>, %arg7: memref<128x128xf32, #tpu.memory_space<vmem>>, %arg8: memref<1x128xf32, #tpu.memory_space<vmem>>, %arg9: memref<8x128xf32, #tpu.memory_space<vmem>>) attributes {dimension_semantics = [], scalar_prefetch = 0 : i64, scratch_operands = 0 : i64, tpu.core_type = #tpu.core_type<tc>} {
    %c0 = arith.constant 0 : index
    %c0_0 = arith.constant 0 : index
    %0 = vector.load %arg0[%c0, %c0_0] : memref<8x16xf32, #tpu.memory_space<vmem>>, vector<8x16xf32>
    %c0_1 = arith.constant 0 : index
    %c0_2 = arith.constant 0 : index
    %1 = vector.load %arg1[%c0_1, %c0_2] : memref<16x128xf32, #tpu.memory_space<vmem>>, vector<16x128xf32>
    %cst = arith.constant dense<0.000000e+00> : vector<8x128xf32>
    %2 = tpu.matmul %0, %1, %cst {dimension_numbers = #tpu.dot_dimension_numbers<[1], [0], [0], [1], [0, 0, 1, 1], [], []>} : vector<8x16xf32>, vector<16x128xf32>, vector<8x128xf32> -> vector<8x128xf32>
    %cst_3 = arith.constant dense<0.000000e+00> : vector<128xf32>
    %3 = vector.multi_reduction <add>, %2, %cst_3 [0] : vector<8x128xf32> to vector<128xf32>
    %4 = vector.shape_cast %3 : vector<128xf32> to vector<1x128xf32>
    %cst_4 = arith.constant 8.000000e+00 : f32
    %5 = vector.broadcast %cst_4 : f32 to vector<1x128xf32>
    %6 = arith.divf %4, %5 : vector<1x128xf32>
    %7 = vector.broadcast %6 : vector<1x128xf32> to vector<8x128xf32>
    %8 = arith.subf %2, %7 : vector<8x128xf32>
    %9 = arith.mulf %8, %8 : vector<8x128xf32>
    %cst_5 = arith.constant dense<0.000000e+00> : vector<128xf32>
    %10 = vector.multi_reduction <add>, %9, %cst_5 [0] : vector<8x128xf32> to vector<128xf32>
    %11 = vector.shape_cast %10 : vector<128xf32> to vector<1x128xf32>
    %cst_6 = arith.constant 8.000000e+00 : f32
    %12 = vector.broadcast %cst_6 : f32 to vector<1x128xf32>
    %13 = arith.divf %11, %12 : vector<1x128xf32>
    %cst_7 = arith.constant 9.99999974E-6 : f32
    %14 = vector.broadcast %cst_7 : f32 to vector<1x128xf32>
    %15 = arith.addf %13, %14 : vector<1x128xf32>
    %16 = math.rsqrt %15 : vector<1x128xf32>
    %17 = vector.broadcast %16 : vector<1x128xf32> to vector<8x128xf32>
    %18 = arith.mulf %8, %17 : vector<8x128xf32>
    %c0_8 = arith.constant 0 : index
    %c0_9 = arith.constant 0 : index
    %19 = vector.load %arg2[%c0_8, %c0_9] : memref<1x128xf32, #tpu.memory_space<vmem>>, vector<1x128xf32>
    %20 = vector.broadcast %19 : vector<1x128xf32> to vector<8x128xf32>
    %21 = arith.mulf %18, %20 : vector<8x128xf32>
    %c0_10 = arith.constant 0 : index
    %c0_11 = arith.constant 0 : index
    %22 = vector.load %arg3[%c0_10, %c0_11] : memref<1x128xf32, #tpu.memory_space<vmem>>, vector<1x128xf32>
    %23 = vector.broadcast %22 : vector<1x128xf32> to vector<8x128xf32>
    %24 = arith.addf %21, %23 : vector<8x128xf32>
    %cst_12 = arith.constant 0.000000e+00 : f32
    %25 = vector.broadcast %cst_12 : f32 to vector<8x128xf32>
    %26 = arith.maximumf %24, %25 : vector<8x128xf32>
    %c0_13 = arith.constant 0 : index
    %c0_14 = arith.constant 0 : index
    %27 = vector.load %arg4[%c0_13, %c0_14] : memref<128x128xf32, #tpu.memory_space<vmem>>, vector<128x128xf32>
    %cst_15 = arith.constant dense<0.000000e+00> : vector<8x128xf32>
    %28 = tpu.matmul %26, %27, %cst_15 {dimension_numbers = #tpu.dot_dimension_numbers<[1], [0], [0], [1], [0, 0, 1, 1], [], []>} : vector<8x128xf32>, vector<128x128xf32>, vector<8x128xf32> -> vector<8x128xf32>
    %cst_16 = arith.constant dense<0.000000e+00> : vector<128xf32>
    %29 = vector.multi_reduction <add>, %28, %cst_16 [0] : vector<8x128xf32> to vector<128xf32>
    %30 = vector.shape_cast %29 : vector<128xf32> to vector<1x128xf32>
    %cst_17 = arith.constant 8.000000e+00 : f32
    %31 = vector.broadcast %cst_17 : f32 to vector<1x128xf32>
    %32 = arith.divf %30, %31 : vector<1x128xf32>
    %33 = vector.broadcast %32 : vector<1x128xf32> to vector<8x128xf32>
    %34 = arith.subf %28, %33 : vector<8x128xf32>
    %35 = arith.mulf %34, %34 : vector<8x128xf32>
    %cst_18 = arith.constant dense<0.000000e+00> : vector<128xf32>
    %36 = vector.multi_reduction <add>, %35, %cst_18 [0] : vector<8x128xf32> to vector<128xf32>
    %37 = vector.shape_cast %36 : vector<128xf32> to vector<1x128xf32>
    %cst_19 = arith.constant 8.000000e+00 : f32
    %38 = vector.broadcast %cst_19 : f32 to vector<1x128xf32>
    %39 = arith.divf %37, %38 : vector<1x128xf32>
    %cst_20 = arith.constant 9.99999974E-6 : f32
    %40 = vector.broadcast %cst_20 : f32 to vector<1x128xf32>
    %41 = arith.addf %39, %40 : vector<1x128xf32>
    %42 = math.rsqrt %41 : vector<1x128xf32>
    %43 = vector.broadcast %42 : vector<1x128xf32> to vector<8x128xf32>
    %44 = arith.mulf %34, %43 : vector<8x128xf32>
    %c0_21 = arith.constant 0 : index
    %c0_22 = arith.constant 0 : index
    %45 = vector.load %arg5[%c0_21, %c0_22] : memref<1x128xf32, #tpu.memory_space<vmem>>, vector<1x128xf32>
    %46 = vector.broadcast %45 : vector<1x128xf32> to vector<8x128xf32>
    %47 = arith.mulf %44, %46 : vector<8x128xf32>
    %c0_23 = arith.constant 0 : index
    %c0_24 = arith.constant 0 : index
    %48 = vector.load %arg6[%c0_23, %c0_24] : memref<1x128xf32, #tpu.memory_space<vmem>>, vector<1x128xf32>
    %49 = vector.broadcast %48 : vector<1x128xf32> to vector<8x128xf32>
    %50 = arith.addf %47, %49 : vector<8x128xf32>
    %cst_25 = arith.constant 0.000000e+00 : f32
    %51 = vector.broadcast %cst_25 : f32 to vector<8x128xf32>
    %52 = arith.maximumf %50, %51 : vector<8x128xf32>
    %c0_26 = arith.constant 0 : index
    %c0_27 = arith.constant 0 : index
    %53 = vector.load %arg7[%c0_26, %c0_27] : memref<128x128xf32, #tpu.memory_space<vmem>>, vector<128x128xf32>
    %cst_28 = arith.constant dense<0.000000e+00> : vector<8x128xf32>
    %54 = tpu.matmul %52, %53, %cst_28 {dimension_numbers = #tpu.dot_dimension_numbers<[1], [0], [0], [1], [0, 0, 1, 1], [], []>} : vector<8x128xf32>, vector<128x128xf32>, vector<8x128xf32> -> vector<8x128xf32>
    %c0_29 = arith.constant 0 : index
    %c0_30 = arith.constant 0 : index
    %55 = vector.load %arg8[%c0_29, %c0_30] : memref<1x128xf32, #tpu.memory_space<vmem>>, vector<1x128xf32>
    %56 = vector.broadcast %55 : vector<1x128xf32> to vector<8x128xf32>
    %57 = arith.addf %54, %56 : vector<8x128xf32>
    %c0_31 = arith.constant 0 : index
    %c0_32 = arith.constant 0 : index
    %58 = vector.load %arg9[%c0_31, %c0_32] : memref<8x128xf32, #tpu.memory_space<vmem>>, vector<8x128xf32>
    tpu.vector_store %arg9[%c0_31, %c0_32], %57 {strides = array<i32>} : memref<8x128xf32, #tpu.memory_space<vmem>>, vector<8x128xf32>,
    return
  }
}

</mosaic_0001>

<llo_original>
// kernel: mlp_forward.1
$region0: #{mlp_forward.1}
  #allocation0 [shape = 'u32[]', space=smem, size = 0x4, offset = 0x4, fixed_abs, tag = 'smem constant byte address 0x4 - core index']
  #allocation1 [shape = 'u32[144,128]{1,0:T(1,128)}', space=vmem, size = 0x12000, scoped, tag = 'internal scratch']
  %s0 = inlined_call_operand.vmem [shape: f32[8,16], index: 0, kind: input, shape index: {}]
  %s1 = inlined_call_operand.hbm [shape: f32[16,128], index: 1, kind: input, shape index: {}]
  %s2 = inlined_call_operand.vmem [shape: f32[1,128], index: 2, kind: input, shape index: {}]
  %s3 = inlined_call_operand.hbm [shape: f32[1,128], index: 3, kind: input, shape index: {}]
  %s4 = inlined_call_operand.hbm [shape: f32[128,128], index: 4, kind: input, shape index: {}]
  %s5 = inlined_call_operand.vmem [shape: f32[1,128], index: 5, kind: input, shape index: {}]
  %s6 = inlined_call_operand.vmem [shape: f32[1,128], index: 6, kind: input, shape index: {}]
  %s7 = inlined_call_operand.hbm [shape: f32[128,128], index: 7, kind: input, shape index: {}]
  %s8 = inlined_call_operand.vmem [shape: f32[1,128], index: 8, kind: input, shape index: {}]
  %s9 = inlined_call_operand.hbm [shape: f32[8,128], index: 9, kind: output, shape index: {}]
  %s10 = sld [smem:[#allocation0]]
  $region62: #{mlp_forward.1} parent=0
    _
  %s12 = ssub.s32 1, %s10
  %s13 = scalar_select 0, %s12, %s10
  $region1: #{mlp_forward.1} parent=0
    #allocation2 [shape = 'u8[8192]{0}', space=vmem, size = 0x2000, scoped, tag = 'input window, operand 1, single buffered']
    #allocation3 [shape = 's32[1]{0}', space=sflag, size = 0x4, scoped, tag = 'scoped memory for mlp_forward.1']
    #allocation4 [shape = 's32[1]{0}', space=sflag, size = 0x4, scoped, tag = 'scoped memory for mlp_forward.1']
    #allocation5 [shape = 'u8[512]{0}', space=vmem, size = 0x400, scoped, tag = 'input window, operand 3, single buffered']
    #allocation6 [shape = 's32[1]{0}', space=sflag, size = 0x4, scoped, tag = 'scoped memory for mlp_forward.1']
    #allocation7 [shape = 'u8[65536]{0}', space=vmem, size = 0x10000, scoped, tag = 'input window, operand 4, single buffered']
    #allocation8 [shape = 'u8[65536]{0}', space=vmem, size = 0x10000, scoped, tag = 'input window, operand 7, single buffered']
    #allocation9 [shape = 's32[1]{0}', space=sflag, size = 0x4, scoped, tag = 'scoped memory for mlp_forward.1']
    #allocation10 [shape = 'u8[4096]{0}', space=vmem, size = 0x1000, scoped, tag = 'output window, operand 0, single buffered']
    %14 = vsyncpa [#allocation3], 0
    %15 = vsyncpa [#allocation6], 0
    %16 = vsyncpa [#allocation9], 0
    %17 = vsyncpa [#allocation4], 0
    // Predicated region
    $region2: #{mlp_forward.1} parent=1 // pred_check
      _
    $region3: #{mlp_forward.1} parent=1 // pred_check_branch
      %19 = sbr.rel (0) target = $region5
    $region4: #{mlp_forward.1} parent=1 // pred_region
      _
    $region5: #{mlp_forward.1} parent=1 // pred_fallthru
      _
    // Predicated region
    $region6: #{mlp_forward.1} parent=1 // pred_check
      _
    $region7: #{mlp_forward.1} parent=1 // pred_check_branch
      %21 = sbr.rel (0) target = $region9
    $region8: #{mlp_forward.1} parent=1 // pred_region
      %s23 = ssub.s32 256, 256
      %24 = vsyncadd [#allocation3], %s23
      %s25 = sshll.u32 [#allocation2], 4
      %s26 = int_to_ptr.vmem [resolvable:$true] %s25
      %31 = dma.hbm_to_vmem [thread:$0]  %s1, 256, %s26, [#allocation3], 128, 128, 8
    $region9: #{mlp_forward.1} parent=1 // pred_fallthru
      _
    // Predicated region
    $region10: #{mlp_forward.1} parent=1 // pred_check
      _
    $region11: #{mlp_forward.1} parent=1 // pred_check_branch
      %33 = sbr.rel (0) target = $region13
    $region12: #{mlp_forward.1} parent=1 // pred_region
      _
    $region13: #{mlp_forward.1} parent=1 // pred_fallthru
      _
    // Predicated region
    $region14: #{mlp_forward.1} parent=1 // pred_check
      _
    $region15: #{mlp_forward.1} parent=1 // pred_check_branch
      %35 = sbr.rel (0) target = $region17
    $region16: #{mlp_forward.1} parent=1 // pred_region
      %s37 = ssub.s32 16, 16
      %38 = vsyncadd [#allocation6], %s37
      %s40 = sshll.u32 [#allocation5], 4
      %s41 = int_to_ptr.vmem [resolvable:$true] %s40
      %43 = dma.hbm_to_vmem [thread:$0]  %s3, 16, %s41, [#allocation6]
    $region17: #{mlp_forward.1} parent=1 // pred_fallthru
      _
    // Predicated region
    $region18: #{mlp_forward.1} parent=1 // pred_check
      _
    $region19: #{mlp_forward.1} parent=1 // pred_check_branch
      %45 = sbr.rel (0) target = $region21
    $region20: #{mlp_forward.1} parent=1 // pred_region
      %s47 = ssub.s32 2048, 2048
      %48 = vsyncadd [#allocation6], %s47
      %s49 = sshll.u32 [#allocation7], 4
      %s50 = int_to_ptr.vmem [resolvable:$true] %s49
      %55 = dma.hbm_to_vmem [thread:$0]  %s4, 2048, %s50, [#allocation6], 128, 128, 8
    $region21: #{mlp_forward.1} parent=1 // pred_fallthru
      _
    // Predicated region
    $region22: #{mlp_forward.1} parent=1 // pred_check
      _
    $region23: #{mlp_forward.1} parent=1 // pred_check_branch
      %57 = sbr.rel (0) target = $region25
    $region24: #{mlp_forward.1} parent=1 // pred_region
      _
    $region25: #{mlp_forward.1} parent=1 // pred_fallthru
      _
    // Predicated region
    $region26: #{mlp_forward.1} parent=1 // pred_check
      _
    $region27: #{mlp_forward.1} parent=1 // pred_check_branch
      %59 = sbr.rel (0) target = $region29
    $region28: #{mlp_forward.1} parent=1 // pred_region
      _
    $region29: #{mlp_forward.1} parent=1 // pred_fallthru
      _
    // Predicated region
    $region30: #{mlp_forward.1} parent=1 // pred_check
      _
    $region31: #{mlp_forward.1} parent=1 // pred_check_branch
      %61 = sbr.rel (0) target = $region33
    $region32: #{mlp_forward.1} parent=1 // pred_region
      %s63 = ssub.s32 2048, 2048
      %64 = vsyncadd [#allocation9], %s63
      %s65 = sshll.u32 [#allocation8], 4
      %s66 = int_to_ptr.vmem [resolvable:$true] %s65
      %71 = dma.hbm_to_vmem [thread:$0]  %s7, 2048, %s66, [#allocation9], 128, 128, 8
    $region33: #{mlp_forward.1} parent=1 // pred_fallthru
      _
    // Predicated region
    $region34: #{mlp_forward.1} parent=1 // pred_check
      _
    $region35: #{mlp_forward.1} parent=1 // pred_check_branch
      %73 = sbr.rel (0) target = $region37
    $region36: #{mlp_forward.1} parent=1 // pred_region
      _
    $region37: #{mlp_forward.1} parent=1 // pred_fallthru
      _
    // Predicated region
    $region38: #{mlp_forward.1} parent=1 // pred_check
      _
    $region39: #{mlp_forward.1} parent=1 // pred_check_branch
      %75 = sbr.rel (0) target = $region41
    $region40: #{mlp_forward.1} parent=1 // pred_region
      %76 = dma.done [#allocation3], 256
    $region41: #{mlp_forward.1} parent=1 // pred_fallthru
      _
    // Predicated region
    $region42: #{mlp_forward.1} parent=1 // pred_check
      _
    $region43: #{mlp_forward.1} parent=1 // pred_check_branch
      %78 = sbr.rel (0) target = $region45
    $region44: #{mlp_forward.1} parent=1 // pred_region
      %79 = dma.done [#allocation6], 16
    $region45: #{mlp_forward.1} parent=1 // pred_fallthru
      _
    // Predicated region
    $region46: #{mlp_forward.1} parent=1 // pred_check
      _
    $region47: #{mlp_forward.1} parent=1 // pred_check_branch
      %81 = sbr.rel (0) target = $region49
    $region48: #{mlp_forward.1} parent=1 // pred_region
      %82 = dma.done [#allocation6], 2048
    $region49: #{mlp_forward.1} parent=1 // pred_fallthru
      _
    // Predicated region
    $region50: #{mlp_forward.1} parent=1 // pred_check
      _
    $region51: #{mlp_forward.1} parent=1 // pred_check_branch
      %84 = sbr.rel (0) target = $region53
    $region52: #{mlp_forward.1} parent=1 // pred_region
      %85 = dma.done [#allocation9], 2048
    $region53: #{mlp_forward.1} parent=1 // pred_fallthru
      _
    %v86 = vld [vmem:[%s0] sm:$0xff]
    %v87 = vld [vmem:[#allocation2] sm:$0xff]
    %v88 = vld [vmem:[#allocation2 + $0x8] sm:$0xff]
    %vm89 = vcmask 130048
    %v91 = vsel %vm89, %v86, 0
    %93 = vmatprep.subr.mxu0 0.0
    %94 = vmatpush1.msra.mxu0 %v87
    %95 = vmatprep.subr.mxu0 0.0
    %96 = vmatpush1.msra.mxu0 %v88
    %97 = vmatprep.subr.mxu0 0.0
    %98 = vmatpush1.msra.mxu0 0.0
    %99 = vmatprep.subr.mxu0 0.0
    %100 = vmatpush1.msra.mxu0 0.0
    %101 = vmatprep.subr.mxu0 0.0
    %102 = vmatpush1.msra.mxu0 0.0
    %103 = vmatprep.subr.mxu0 0.0
    %104 = vmatpush1.msra.mxu0 0.0
    %105 = vmatprep.subr.mxu0 0.0
    %106 = vmatpush1.msra.mxu0 0.0
    %107 = vmatprep.subr.mxu0 0.0
    %108 = vmatpush1.msra.mxu0 0.0
    %109 = vmatprep.subr.mxu0 0.0
    %110 = vmatpush1.msra.mxu0 0.0
    %111 = vmatprep.subr.mxu0 0.0
    %112 = vmatpush1.msra.mxu0 0.0
    %113 = vmatprep.subr.mxu0 0.0
    %114 = vmatpush1.msra.mxu0 0.0
    %115 = vmatprep.subr.mxu0 0.0
    %116 = vmatpush1.msra.mxu0 0.0
    %117 = vmatprep.subr.mxu0 0.0
    %118 = vmatpush1.msra.mxu0 0.0
    %119 = vmatprep.subr.mxu0 0.0
    %120 = vmatpush1.msra.mxu0 0.0
    %121 = vmatprep.subr.mxu0 0.0
    %122 = vmatpush1.msra.mxu0 0.0
    %123 = vmatprep.subr.mxu0 0.0
    %124 = vmatpush1.msra.mxu0 0.0
    %125 = vmatprep.subr.mxu0 0.0
    %126 = vmatpush1.msra.mxu0 0.0
    %127 = vmatprep.subr.mxu0 0.0
    %128 = vmatpush1.msra.mxu0 0.0
    %129 = vmatprep.subr.mxu0 0.0
    %130 = vmatpush1.msra.mxu0 0.0
    %131 = vmatprep.subr.mxu0 0.0
    %132 = vmatpush1.msra.mxu0 0.0
    %133 = vmatprep.subr.mxu0 0.0
    %134 = vmatpush1.msra.mxu0 0.0
    %135 = vmatprep.subr.mxu0 0.0
    %136 = vmatpush1.msra.mxu0 0.0
    %137 = vmatprep.subr.mxu0 0.0
    %138 = vmatpush1.msra.mxu0 0.0
    %139 = vmatprep.subr.mxu0 0.0
    %140 = vmatpush1.msra.mxu0 0.0
    %141 = vmatprep.subr.mxu0 0.0
    %142 = vmatpush1.msra.mxu0 0.0
    %143 = vmatprep.subr.mxu0 0.0
    %144 = vmatpush1.msra.mxu0 0.0
    %145 = vmatprep.subr.mxu0 0.0
    %146 = vmatpush1.msra.mxu0 0.0
    %147 = vmatprep.subr.mxu0 0.0
    %148 = vmatpush1.msra.mxu0 0.0
    %149 = vmatprep.subr.mxu0 0.0
    %150 = vmatpush1.msra.mxu0 0.0
    %151 = vmatprep.subr.mxu0 0.0
    %152 = vmatpush1.msra.mxu0 0.0
    %153 = vmatprep.subr.mxu0 0.0
    %154 = vmatpush1.msra.mxu0 0.0
    %155 = vmatprep.subr.mxu0 0.0
    %156 = vmatpush1.msra.mxu0 0.0
    %157 = vmatprep.mubr.f32.mxu0 0.0
    %158 = vmatmul.mubr.f32.gmra.mrb[0].mxu0 %v91
    %v159 = vpop.f32.mrb[0].mxu0
    %v160 = vadd.f32 0.0, %v159
    %v161 = vpop.f32.mrb[0].mxu0
    %162 = vdwg.mxu0
    %v163 = vrot.slane %v160, 4
    %v164 = vadd.f32 %v160, %v163
    %v165 = vrot.slane %v164, 2
    %v166 = vadd.f32 %v164, %v165
    %v167 = vrot.slane %v166, 1
    %v168 = vadd.f32 %v166, %v167
    %v169 = vrcp.pop 8.0
    %v170 = vmul.f32 %v168, %v169
    %v171 = vsub.f32 %v160, %v170
    %v172 = vmul.f32 %v171, %v171
    %v173 = vrot.slane %v172, 4
    %v174 = vadd.f32 %v172, %v173
    %v175 = vrot.slane %v174, 2
    %v176 = vadd.f32 %v174, %v175
    %v177 = vrot.slane %v176, 1
    %v178 = vadd.f32 %v176, %v177
    %v179 = vmul.f32 %v178, %v169
    %v180 = vadd.f32 %v179, 1e-05
    %v181 = vrsqrt.pop %v180
    %v182 = vmul.f32 %v171, %v181
    %v183 = vld [vmem:[%s2] sm:$0x1]
    %v185 = vlaneseq
    %v186 = vshrl.u32 %v185, 7
    %v187 = vsub.s32 0, %v186
    %v188 = vrot.slane %v183, %v187
    %v190 = vmul.f32 %v182, %v188
    %v191 = vld [vmem:[#allocation5] sm:$0x1]
    %v193 = vlaneseq
    %v194 = vshrl.u32 %v193, 7
    %v195 = vsub.s32 0, %v194
    %v196 = vrot.slane %v191, %v195
    %v198 = vadd.f32 %v190, %v196
    %v199 = vmax.f32 %v198, 0.0
    %v200 = vld [vmem:[#allocation7] sm:$0xff]
    %v201 = vld [vmem:[#allocation7 + $0x8] sm:$0xff]
    %v202 = vld [vmem:[#allocation7 + $0x10] sm:$0xff]
    %v203 = vld [vmem:[#allocation7 + $0x18] sm:$0xff]
    %v204 = vld [vmem:[#allocation7 + $0x20] sm:$0xff]
    %v205 = vld [vmem:[#allocation7 + $0x28] sm:$0xff]
    %v206 = vld [vmem:[#allocation7 + $0x30] sm:$0xff]
    %v207 = vld [vmem:[#allocation7 + $0x38] sm:$0xff]
    %v208 = vld [vmem:[#allocation7 + $0x40] sm:$0xff]
    %v209 = vld [vmem:[#allocation7 + $0x48] sm:$0xff]
    %v210 = vld [vmem:[#allocation7 + $0x50] sm:$0xff]
    %v211 = vld [vmem:[#allocation7 + $0x58] sm:$0xff]
    %v212 = vld [vmem:[#allocation7 + $0x60] sm:$0xff]
    %v213 = vld [vmem:[#allocation7 + $0x68] sm:$0xff]
    %v214 = vld [vmem:[#allocation7 + $0x70] sm:$0xff]
    %v215 = vld [vmem:[#allocation7 + $0x78] sm:$0xff]
    %216 = vmatprep.subr.mxu0 0.0
    %217 = vmatpush1.msra.mxu0 %v200
    %218 = vmatprep.subr.mxu0 0.0
    %219 = vmatpush1.msra.mxu0 %v201
    %220 = vmatprep.subr.mxu0 0.0
    %221 = vmatpush1.msra.mxu0 %v202
    %222 = vmatprep.subr.mxu0 0.0
    %223 = vmatpush1.msra.mxu0 %v203
    %224 = vmatprep.subr.mxu0 0.0
    %225 = vmatpush1.msra.mxu0 %v204
    %226 = vmatprep.subr.mxu0 0.0
    %227 = vmatpush1.msra.mxu0 %v205
    %228 = vmatprep.subr.mxu0 0.0
    %229 = vmatpush1.msra.mxu0 %v206
    %230 = vmatprep.subr.mxu0 0.0
    %231 = vmatpush1.msra.mxu0 %v207
    %232 = vmatprep.subr.mxu0 0.0
    %233 = vmatpush1.msra.mxu0 %v208
    %234 = vmatprep.subr.mxu0 0.0
    %235 = vmatpush1.msra.mxu0 %v209
    %236 = vmatprep.subr.mxu0 0.0
    %237 = vmatpush1.msra.mxu0 %v210
    %238 = vmatprep.subr.mxu0 0.0
    %239 = vmatpush1.msra.mxu0 %v211
    %240 = vmatprep.subr.mxu0 0.0
    %241 = vmatpush1.msra.mxu0 %v212
    %242 = vmatprep.subr.mxu0 0.0
    %243 = vmatpush1.msra.mxu0 %v213
    %244 = vmatprep.subr.mxu0 0.0
    %245 = vmatpush1.msra.mxu0 %v214
    %246 = vmatprep.subr.mxu0 0.0
    %247 = vmatpush1.msra.mxu0 %v215
    %248 = vmatprep.subr.mxu0 0.0
    %249 = vmatpush1.msra.mxu0 0.0
    %250 = vmatprep.subr.mxu0 0.0
    %251 = vmatpush1.msra.mxu0 0.0
    %252 = vmatprep.subr.mxu0 0.0
    %253 = vmatpush1.msra.mxu0 0.0
    %254 = vmatprep.subr.mxu0 0.0
    %255 = vmatpush1.msra.mxu0 0.0
    %256 = vmatprep.subr.mxu0 0.0
    %257 = vmatpush1.msra.mxu0 0.0
    %258 = vmatprep.subr.mxu0 0.0
    %259 = vmatpush1.msra.mxu0 0.0
    %260 = vmatprep.subr.mxu0 0.0
    %261 = vmatpush1.msra.mxu0 0.0
    %262 = vmatprep.subr.mxu0 0.0
    %263 = vmatpush1.msra.mxu0 0.0
    %264 = vmatprep.subr.mxu0 0.0
    %265 = vmatpush1.msra.mxu0 0.0
    %266 = vmatprep.subr.mxu0 0.0
    %267 = vmatpush1.msra.mxu0 0.0
    %268 = vmatprep.subr.mxu0 0.0
    %269 = vmatpush1.msra.mxu0 0.0
    %270 = vmatprep.subr.mxu0 0.0
    %271 = vmatpush1.msra.mxu0 0.0
    %272 = vmatprep.subr.mxu0 0.0
    %273 = vmatpush1.msra.mxu0 0.0
    %274 = vmatprep.subr.mxu0 0.0
    %275 = vmatpush1.msra.mxu0 0.0
    %276 = vmatprep.subr.mxu0 0.0
    %277 = vmatpush1.msra.mxu0 0.0
    %278 = vmatprep.subr.mxu0 0.0
    %279 = vmatpush1.msra.mxu0 0.0
    %280 = vmatprep.mubr.f32.mxu0 0.0
    %281 = vmatmul.mubr.f32.gmra.mrb[0].mxu0 %v199
    %v282 = vpop.f32.mrb[0].mxu0
    %v283 = vadd.f32 0.0, %v282
    %v284 = vpop.f32.mrb[0].mxu0
    %285 = vdwg.mxu0
    %v286 = vrot.slane %v283, 4
    %v287 = vadd.f32 %v283, %v286
    %v288 = vrot.slane %v287, 2
    %v289 = vadd.f32 %v287, %v288
    %v290 = vrot.slane %v289, 1
    %v291 = vadd.f32 %v289, %v290
    %v292 = vmul.f32 %v291, %v169
    %v293 = vsub.f32 %v283, %v292
    %v294 = vmul.f32 %v293, %v293
    %v295 = vrot.slane %v294, 4
    %v296 = vadd.f32 %v294, %v295
    %v297 = vrot.slane %v296, 2
    %v298 = vadd.f32 %v296, %v297
    %v299 = vrot.slane %v298, 1
    %v300 = vadd.f32 %v298, %v299
    %v301 = vmul.f32 %v300, %v169
    %v302 = vadd.f32 %v301, 1e-05
    %v303 = vrsqrt.pop %v302
    %v304 = vmul.f32 %v293, %v303
    %v305 = vld [vmem:[%s5] sm:$0x1]
    %v307 = vlaneseq
    %v308 = vshrl.u32 %v307, 7
    %v309 = vsub.s32 0, %v308
    %v310 = vrot.slane %v305, %v309
    %v312 = vmul.f32 %v304, %v310
    %v313 = vld [vmem:[%s6] sm:$0x1]
    %v315 = vlaneseq
    %v316 = vshrl.u32 %v315, 7
    %v317 = vsub.s32 0, %v316
    %v318 = vrot.slane %v313, %v317
    %v320 = vadd.f32 %v312, %v318
    %v321 = vmax.f32 %v320, 0.0
    %v322 = vld [vmem:[#allocation8] sm:$0xff]
    %v323 = vld [vmem:[#allocation8 + $0x8] sm:$0xff]
    %v324 = vld [vmem:[#allocation8 + $0x10] sm:$0xff]
    %v325 = vld [vmem:[#allocation8 + $0x18] sm:$0xff]
    %v326 = vld [vmem:[#allocation8 + $0x20] sm:$0xff]
    %v327 = vld [vmem:[#allocation8 + $0x28] sm:$0xff]
    %v328 = vld [vmem:[#allocation8 + $0x30] sm:$0xff]
    %v329 = vld [vmem:[#allocation8 + $0x38] sm:$0xff]
    %v330 = vld [vmem:[#allocation8 + $0x40] sm:$0xff]
    %v331 = vld [vmem:[#allocation8 + $0x48] sm:$0xff]
    %v332 = vld [vmem:[#allocation8 + $0x50] sm:$0xff]
    %v333 = vld [vmem:[#allocation8 + $0x58] sm:$0xff]
    %v334 = vld [vmem:[#allocation8 + $0x60] sm:$0xff]
    %v335 = vld [vmem:[#allocation8 + $0x68] sm:$0xff]
    %v336 = vld [vmem:[#allocation8 + $0x70] sm:$0xff]
    %v337 = vld [vmem:[#allocation8 + $0x78] sm:$0xff]
    %v338 = vld [vmem:[%s8] sm:$0x1]
    %v340 = vlaneseq
    %v341 = vshrl.u32 %v340, 7
    %v342 = vsub.s32 0, %v341
    %v343 = vrot.slane %v338, %v342
    %345 = vmatprep.subr.mxu0 0.0
    %346 = vmatpush1.msra.mxu0 %v322
    %347 = vmatprep.subr.mxu0 0.0
    %348 = vmatpush1.msra.mxu0 %v323
    %349 = vmatprep.subr.mxu0 0.0
    %350 = vmatpush1.msra.mxu0 %v324
    %351 = vmatprep.subr.mxu0 0.0
    %352 = vmatpush1.msra.mxu0 %v325
    %353 = vmatprep.subr.mxu0 0.0
    %354 = vmatpush1.msra.mxu0 %v326
    %355 = vmatprep.subr.mxu0 0.0
    %356 = vmatpush1.msra.mxu0 %v327
    %357 = vmatprep.subr.mxu0 0.0
    %358 = vmatpush1.msra.mxu0 %v328
    %359 = vmatprep.subr.mxu0 0.0
    %360 = vmatpush1.msra.mxu0 %v329
    %361 = vmatprep.subr.mxu0 0.0
    %362 = vmatpush1.msra.mxu0 %v330
    %363 = vmatprep.subr.mxu0 0.0
    %364 = vmatpush1.msra.mxu0 %v331
    %365 = vmatprep.subr.mxu0 0.0
    %366 = vmatpush1.msra.mxu0 %v332
    %367 = vmatprep.subr.mxu0 0.0
    %368 = vmatpush1.msra.mxu0 %v333
    %369 = vmatprep.subr.mxu0 0.0
    %370 = vmatpush1.msra.mxu0 %v334
    %371 = vmatprep.subr.mxu0 0.0
    %372 = vmatpush1.msra.mxu0 %v335
    %373 = vmatprep.subr.mxu0 0.0
    %374 = vmatpush1.msra.mxu0 %v336
    %375 = vmatprep.subr.mxu0 0.0
    %376 = vmatpush1.msra.mxu0 %v337
    %377 = vmatprep.subr.mxu0 0.0
    %378 = vmatpush1.msra.mxu0 0.0
    %379 = vmatprep.subr.mxu0 0.0
    %380 = vmatpush1.msra.mxu0 0.0
    %381 = vmatprep.subr.mxu0 0.0
    %382 = vmatpush1.msra.mxu0 0.0
    %383 = vmatprep.subr.mxu0 0.0
    %384 = vmatpush1.msra.mxu0 0.0
    %385 = vmatprep.subr.mxu0 0.0
    %386 = vmatpush1.msra.mxu0 0.0
    %387 = vmatprep.subr.mxu0 0.0
    %388 = vmatpush1.msra.mxu0 0.0
    %389 = vmatprep.subr.mxu0 0.0
    %390 = vmatpush1.msra.mxu0 0.0
    %391 = vmatprep.subr.mxu0 0.0
    %392 = vmatpush1.msra.mxu0 0.0
    %393 = vmatprep.subr.mxu0 0.0
    %394 = vmatpush1.msra.mxu0 0.0
    %395 = vmatprep.subr.mxu0 0.0
    %396 = vmatpush1.msra.mxu0 0.0
    %397 = vmatprep.subr.mxu0 0.0
    %398 = vmatpush1.msra.mxu0 0.0
    %399 = vmatprep.subr.mxu0 0.0
    %400 = vmatpush1.msra.mxu0 0.0
    %401 = vmatprep.subr.mxu0 0.0
    %402 = vmatpush1.msra.mxu0 0.0
    %403 = vmatprep.subr.mxu0 0.0
    %404 = vmatpush1.msra.mxu0 0.0
    %405 = vmatprep.subr.mxu0 0.0
    %406 = vmatpush1.msra.mxu0 0.0
    %407 = vmatprep.subr.mxu0 0.0
    %408 = vmatpush1.msra.mxu0 0.0
    %409 = vmatprep.mubr.f32.mxu0 0.0
    %410 = vmatmul.mubr.f32.gmra.mrb[0].mxu0 %v321
    %v411 = vpop.f32.mrb[0].mxu0
    %v412 = vadd.f32 %v343, %v411
    %v413 = vpop.f32.mrb[0].mxu0
    %414 = vdwg.mxu0
    %415 = vst [vmem:[#allocation10] sm:$0xff] %v412
    // Predicated region
    $region54: #{mlp_forward.1} parent=1 // pred_check
      _
    $region55: #{mlp_forward.1} parent=1 // pred_check_branch
      %417 = sbr.rel (0) target = $region57
    $region56: #{mlp_forward.1} parent=1 // pred_region
      %s419 = ssub.s32 128, 128
      %420 = vsyncadd [#allocation4], %s419
      %s422 = sshll.u32 [#allocation10], 4
      %s423 = int_to_ptr.vmem [resolvable:$true] %s422
      %425 = dma.vmem_to_hbm [thread:$0]  %s423, 128, %s9, [#allocation4]
    $region57: #{mlp_forward.1} parent=1 // pred_fallthru
      _
    // Predicated region
    $region58: #{mlp_forward.1} parent=1 // pred_check
      _
    $region59: #{mlp_forward.1} parent=1 // pred_check_branch
      %427 = sbr.rel (0) target = $region61
    $region60: #{mlp_forward.1} parent=1 // pred_region
      %428 = dma.done [#allocation4], 128
    $region61: #{mlp_forward.1} parent=1 // pred_fallthru
      _
    %429 = vsyncpa [#allocation3], 1
    %430 = vsyncpa [#allocation6], 1
    %431 = vsyncpa [#allocation9], 1
    %432 = vsyncpa [#allocation4], 1

</llo_original>
